<compile_context>
chip_gen: v5e
topology: v5e:2x2
jax: 0.10.0
libtpu: 0.0.40
codegen_flags: <defaults>
</compile_context>

<pallas_src>
import jax
import jax.numpy as jnp
from jax.experimental import pallas as pl
from jax.experimental.pallas import tpu as pltpu


def projection_head_kernel(x_ref, w1_ref, b1_ref, w2_ref, b2_ref, o_ref):
    # Stream x in its native dtype; cast to bf16 on the VPU for the MXU.
    x = x_ref[...]
    if x.dtype != jnp.bfloat16:
        x = x.astype(jnp.bfloat16)
    # fc1: [TB, D_in](bf16) @ [D_in, H](bf16) -> f32 accumulator
    h = jnp.dot(x, w1_ref[...], preferred_element_type=jnp.float32)
    # bias + ReLU on the f32 accumulator (b1 is a [1, H] f32 row, broadcast
    # over the batch/sublane axis)
    h = jnp.maximum(h + b1_ref[...], 0.0)
    # Downcast hidden to bf16 for the second MXU pass (real precision-reducing
    # cast vs. the all-f32 PyTorch reference; acceptable for a SimCLR head).
    h = h.astype(w2_ref.dtype)
    # fc2: [TB, H](bf16) @ [H, D_out](bf16) -> f32 accumulator
    o = jnp.dot(h, w2_ref[...], preferred_element_type=jnp.float32)
    o_ref[...] = (o + b2_ref[...]).astype(o_ref.dtype)


def _round_up(n, m):
    return ((n + m - 1) // m) * m


def projection_head(x, w1, b1, w2, b2, *, block_b=1024, out_dtype=jnp.float32):
    """Fused SimCLR projection head.

    x:  [B, D_in]   (any float dtype; cast to bf16 inside the kernel)
    w1: [D_in, H]   (transposed vs. torch)    b1: [1, H]
    w2: [H, D_out]  (transposed vs. torch)    b2: [1, D_out]
    Returns [B, D_out] in `out_dtype` (default f32, matching the torch module).
    """
    B, d_in = x.shape
    h_dim = w1.shape[1]
    d_out = w2.shape[1]

    # Batch tile:
    #  * multiple of 16 (bf16 sublane packing),
    #  * small enough that the grid gets >= 2 steps when B allows it (so the
    #    "parallel" axis spans both v7x TensorCores),
    #  * capped at 2048 so double-buffered x/out tiles fit v5e's 16 MiB scoped
    #    VMEM default.
    half = _round_up(pl.cdiv(B, 2), 16)
    tb = max(16, min(block_b, half, 2048))
    grid_b = pl.cdiv(B, tb)

    # Small (~0.4 MiB) one-time weight casts; x itself is NOT touched here.
    w1_bf = w1.astype(jnp.bfloat16)
    w2_bf = w2.astype(jnp.bfloat16)
    b1_f = b1.astype(jnp.float32)
    b2_f = b2.astype(jnp.float32)

    x_itemsize = jnp.dtype(x.dtype).itemsize
    out_itemsize = jnp.dtype(out_dtype).itemsize
    flops = 2 * B * (d_in * h_dim + h_dim * d_out)
    bytes_accessed = (
        B * d_in * x_itemsize         # x stream (native dtype)
        + B * d_out * out_itemsize    # output stream
        + d_in * h_dim * 2            # w1 (bf16, resident)
        + h_dim * d_out * 2           # w2 (bf16, resident)
        + (h_dim + d_out) * 4         # biases (f32, resident)
    )

    out = pl.pallas_call(
        projection_head_kernel,
        out_shape=jax.ShapeDtypeStruct((B, d_out), out_dtype),
        grid_spec=pltpu.PrefetchScalarGridSpec(
            num_scalar_prefetch=0,
            grid=(grid_b,),
            in_specs=[
                pl.BlockSpec((tb, d_in), lambda i: (i, 0)),       # x: streamed
                pl.BlockSpec((d_in, h_dim), lambda i: (0, 0)),    # w1: resident
                pl.BlockSpec((1, h_dim), lambda i: (0, 0)),       # b1: resident
                pl.BlockSpec((h_dim, d_out), lambda i: (0, 0)),   # w2: resident
                pl.BlockSpec((1, d_out), lambda i: (0, 0)),       # b2: resident
            ],
            out_specs=pl.BlockSpec((tb, d_out), lambda i: (i, 0)),
        ),
        compiler_params=pltpu.CompilerParams(
            dimension_semantics=("parallel",),
        ),
        cost_estimate=pl.CostEstimate(
            flops=flops, transcendentals=0, bytes_accessed=bytes_accessed
        ),
    )(x, w1_bf, b1_f, w2_bf, b2_f)

    return out


def init_linear_params(key, fan_in, fan_out):
    """torch.nn.Linear default init: U(-1/sqrt(fan_in), 1/sqrt(fan_in)).
    Weight returned transposed ([fan_in, fan_out]) for row-major MXU matmul."""
    kw, kb = jax.random.split(key)
    bound = 1.0 / jnp.sqrt(fan_in)
    w = jax.random.uniform(kw, (fan_in, fan_out), jnp.float32, -bound, bound)
    b = jax.random.uniform(kb, (1, fan_out), jnp.float32, -bound, bound)
    return w, b


if __name__ == "__main__":
    # Small shapes consistent with the module; B=256 gives a 2-step batch grid
    # (tb=128) via the v7x-friendly tile heuristic.
    B, INPUT_DIM, HIDDEN_DIM, OUTPUT_DIM = 256, 512, 256, 128

    key = jax.random.PRNGKey(0)
    kx, k1, k2 = jax.random.split(key, 3)

    x = jax.random.normal(kx, (B, INPUT_DIM), jnp.float32)
    w1, b1 = init_linear_params(k1, INPUT_DIM, HIDDEN_DIM)
    w2, b2 = init_linear_params(k2, HIDDEN_DIM, OUTPUT_DIM)

    out = projection_head(x, w1, b1, w2, b2)
    out = jax.block_until_ready(out)
    assert out.shape == (B, OUTPUT_DIM)
    assert out.dtype == jnp.float32

    # Pure-JAX reference emulating the kernel's bf16-input / f32-accumulate path.
    xr = x.astype(jnp.bfloat16).astype(jnp.float32)
    w1r = w1.astype(jnp.bfloat16).astype(jnp.float32)
    w2r = w2.astype(jnp.bfloat16).astype(jnp.float32)
    h_ref = jnp.maximum(xr @ w1r + b1, 0.0)
    ref = h_ref.astype(jnp.bfloat16).astype(jnp.float32) @ w2r + b2
    assert jnp.allclose(out, ref, atol=2e-2, rtol=2e-2)

    # Looser sanity check against the full-f32 math (bf16 rounding error only).
    ref_f32 = jnp.maximum(x @ w1 + b1, 0.0) @ w2 + b2
    assert jnp.allclose(out, ref_f32, atol=1e-1, rtol=1e-1)

    print("KERNEL_OK")
</pallas_src>

<mosaic_0001>
module attributes {stable_mosaic.version = 11 : i64} {
  func.func @projection_head_kernel(%arg0: i32, %arg1: memref<128x512xf32, #tpu.memory_space<vmem>>, %arg2: memref<512x256xbf16, #tpu.memory_space<vmem>>, %arg3: memref<1x256xf32, #tpu.memory_space<vmem>>, %arg4: memref<256x128xbf16, #tpu.memory_space<vmem>>, %arg5: memref<1x128xf32, #tpu.memory_space<vmem>>, %arg6: memref<128x128xf32, #tpu.memory_space<vmem>>) attributes {dimension_semantics = [#tpu.dimension_semantics<parallel>], iteration_bounds = array<i64: 2>, scalar_prefetch = 0 : i64, scratch_operands = 0 : i64, tpu.core_type = #tpu.core_type<tc>, window_params = [{transform_indices = @transform_0, window_bounds = array<i64: 128, 512>}, {pipeline_mode = #tpu.pipeline_mode<synchronous>, transform_indices = @transform_1, window_bounds = array<i64: 512, 256>}, {pipeline_mode = #tpu.pipeline_mode<synchronous>, transform_indices = @transform_2, window_bounds = array<i64: 1, 256>}, {pipeline_mode = #tpu.pipeline_mode<synchronous>, transform_indices = @transform_3, window_bounds = array<i64: 256, 128>}, {pipeline_mode = #tpu.pipeline_mode<synchronous>, transform_indices = @transform_4, window_bounds = array<i64: 1, 128>}, {transform_indices = @transform_5, window_bounds = array<i64: 128, 128>}]} {
    %c0 = arith.constant 0 : index
    %c0_0 = arith.constant 0 : index
    %0 = vector.load %arg1[%c0, %c0_0] : memref<128x512xf32, #tpu.memory_space<vmem>>, vector<128x512xf32>
    %1 = arith.truncf %0 : vector<128x512xf32> to vector<128x512xbf16>
    %c0_1 = arith.constant 0 : index
    %c0_2 = arith.constant 0 : index
    %2 = vector.load %arg2[%c0_1, %c0_2] : memref<512x256xbf16, #tpu.memory_space<vmem>>, vector<512x256xbf16>
    %cst = arith.constant dense<0.000000e+00> : vector<128x256xf32>
    %3 = tpu.matmul %1, %2, %cst {dimension_numbers = #tpu.dot_dimension_numbers<[1], [0], [0], [1], [0, 0, 1, 1], [], []>} : vector<128x512xbf16>, vector<512x256xbf16>, vector<128x256xf32> -> vector<128x256xf32>
    %c0_3 = arith.constant 0 : index
    %c0_4 = arith.constant 0 : index
    %4 = vector.load %arg3[%c0_3, %c0_4] : memref<1x256xf32, #tpu.memory_space<vmem>>, vector<1x256xf32>
    %5 = vector.broadcast %4 : vector<1x256xf32> to vector<128x256xf32>
    %6 = arith.addf %3, %5 : vector<128x256xf32>
    %cst_5 = arith.constant 0.000000e+00 : f32
    %7 = vector.broadcast %cst_5 : f32 to vector<128x256xf32>
    %8 = arith.maximumf %6, %7 : vector<128x256xf32>
    %9 = arith.truncf %8 : vector<128x256xf32> to vector<128x256xbf16>
    %c0_6 = arith.constant 0 : index
    %c0_7 = arith.constant 0 : index
    %10 = vector.load %arg4[%c0_6, %c0_7] : memref<256x128xbf16, #tpu.memory_space<vmem>>, vector<256x128xbf16>
    %cst_8 = arith.constant dense<0.000000e+00> : vector<128x128xf32>
    %11 = tpu.matmul %9, %10, %cst_8 {dimension_numbers = #tpu.dot_dimension_numbers<[1], [0], [0], [1], [0, 0, 1, 1], [], []>} : vector<128x256xbf16>, vector<256x128xbf16>, vector<128x128xf32> -> vector<128x128xf32>
    %c0_9 = arith.constant 0 : index
    %c0_10 = arith.constant 0 : index
    %12 = vector.load %arg5[%c0_9, %c0_10] : memref<1x128xf32, #tpu.memory_space<vmem>>, vector<1x128xf32>
    %13 = vector.broadcast %12 : vector<1x128xf32> to vector<128x128xf32>
    %14 = arith.addf %11, %13 : vector<128x128xf32>
    %c0_11 = arith.constant 0 : index
    %c0_12 = arith.constant 0 : index
    %15 = vector.load %arg6[%c0_11, %c0_12] : memref<128x128xf32, #tpu.memory_space<vmem>>, vector<128x128xf32>
    tpu.vector_store %arg6[%c0_11, %c0_12], %14 {strides = array<i32>} : memref<128x128xf32, #tpu.memory_space<vmem>>, vector<128x128xf32>,
    return
  }
  func.func @transform_0(%arg0: i32) -> (i32, i32) {
    %c0_i32 = arith.constant 0 : i32
    %c0_i32_0 = arith.constant 0 : i32
    return %arg0, %c0_i32 : i32, i32
  }
  func.func @transform_1(%arg0: i32) -> (i32, i32) {
    %c0_i32 = arith.constant 0 : i32
    %c0_i32_0 = arith.constant 0 : i32
    %c0_i32_1 = arith.constant 0 : i32
    return %c0_i32, %c0_i32_0 : i32, i32
  }
  func.func @transform_2(%arg0: i32) -> (i32, i32) {
    %c0_i32 = arith.constant 0 : i32
    %c0_i32_0 = arith.constant 0 : i32
    %c0_i32_1 = arith.constant 0 : i32
    return %c0_i32, %c0_i32_0 : i32, i32
  }
  func.func @transform_3(%arg0: i32) -> (i32, i32) {
    %c0_i32 = arith.constant 0 : i32
    %c0_i32_0 = arith.constant 0 : i32
    %c0_i32_1 = arith.constant 0 : i32
    return %c0_i32, %c0_i32_0 : i32, i32
  }
  func.func @transform_4(%arg0: i32) -> (i32, i32) {
    %c0_i32 = arith.constant 0 : i32
    %c0_i32_0 = arith.constant 0 : i32
    %c0_i32_1 = arith.constant 0 : i32
    return %c0_i32, %c0_i32_0 : i32, i32
  }
  func.func @transform_5(%arg0: i32) -> (i32, i32) {
    %c0_i32 = arith.constant 0 : i32
    %c0_i32_0 = arith.constant 0 : i32
    return %arg0, %c0_i32 : i32, i32
  }
}

</mosaic_0001>

<llo_original>
// kernel: tpu_custom_call.1
$region0: #{tpu_custom_call.1}
  #allocation0 [shape = 'u32[]', space=smem, size = 0x4, offset = 0x4, fixed_abs, tag = 'smem constant byte address 0x4 - core index']
  #allocation1 [shape = 'u32[72,128]{1,0:T(1,128)}', space=vmem, size = 0x9000, scoped, tag = 'internal scratch']
  %s0 = inlined_call_operand.hbm [shape: f32[256,512], index: 0, kind: input, shape index: {}]
  %s1 = inlined_call_operand.hbm [shape: bf16[512,256], index: 1, kind: input, shape index: {}]
  %s2 = inlined_call_operand.hbm [shape: f32[1,256], index: 2, kind: input, shape index: {}]
  %s3 = inlined_call_operand.hbm [shape: bf16[256,128], index: 3, kind: input, shape index: {}]
  %s4 = inlined_call_operand.vmem [shape: f32[1,128], index: 4, kind: input, shape index: {}]
  %s5 = inlined_call_operand.hbm [shape: f32[256,128], index: 5, kind: output, shape index: {}]
  %s6 = sld [smem:[#allocation0]]
  $region69: #{tpu_custom_call.1} parent=0
    _
  %s8 = ssub.s32 1, %s6
  %s9 = scalar_select 0, %s8, %s6
  $region1: #{tpu_custom_call.1} parent=0
    #allocation2 [shape = 'u8[524288]{0}', space=vmem, size = 0x80000, scoped, tag = 'input window, operand 0']
    #allocation3 [shape = 's32[2]{0}', space=sflag, size = 0x8, scoped, tag = 'scoped memory for tpu_custom_call.1']
    #allocation4 [shape = 's32[2]{0}', space=sflag, size = 0x8, scoped, tag = 'scoped memory for tpu_custom_call.1']
    #allocation5 [shape = 'u8[262144]{0}', space=vmem, size = 0x40000, scoped, tag = 'input window, operand 1, single buffered']
    #allocation6 [shape = 's32[1]{0}', space=sflag, size = 0x4, scoped, tag = 'scoped memory for tpu_custom_call.1']
    #allocation7 [shape = 'u8[1024]{0}', space=vmem, size = 0x400, scoped, tag = 'input window, operand 2, single buffered']
    #allocation8 [shape = 'u8[65536]{0}', space=vmem, size = 0x10000, scoped, tag = 'input window, operand 3, single buffered']
    #allocation9 [shape = 's32[1]{0}', space=sflag, size = 0x4, scoped, tag = 'scoped memory for tpu_custom_call.1']
    #allocation10 [shape = 'u8[131072]{0}', space=vmem, size = 0x20000, scoped, tag = 'output window, operand 0']
    %10 = vsyncpa [#allocation3], 0
    %s11 = scalar_lea.sflag [#allocation3], 1
    %12 = vsyncpa %s11, 0
    %13 = vsyncpa [#allocation6], 0
    %14 = vsyncpa [#allocation9], 0
    %15 = vsyncpa [#allocation4], 0
    %s16 = scalar_lea.sflag [#allocation4], 1
    %17 = vsyncpa %s16, 0
    loop: start=0, step=1, limit=4
    $region2: #{tpu_custom_call.1} parent=1 // loop_pre_header
      _
    $region3: #{tpu_custom_call.1} parent=1 // loop_header
      %s19 = sphi 0, %s23
      %p20 = scmp.ge.s32.totalorder %s19, 4
      %s29 = sphi 0, %s31
      %s32 = sphi 0, %s29
      %s33 = sphi 0, %s32
      %s49 = sphi 0, %s33
      %s53 = sphi 0, %s53
      %s55 = sphi 0, %s53
      %s56 = sphi 0, %s55
      %s70 = sphi 0, %s56
      %s74 = sphi 0, %s74
      %s76 = sphi 0, %s74
      %s77 = sphi 0, %s76
      %s91 = sphi 0, %s77
      %s95 = sphi 0, %s95
      %s97 = sphi 0, %s95
      %s98 = sphi 0, %s97
      %s112 = sphi 0, %s98
      %s116 = sphi 0, %s116
      %s118 = sphi 0, %s116
      %s119 = sphi 0, %s118
      %s133 = sphi 0, %s119
      %s139 = sphi 0, %s141
      %s142 = sphi 0, %s139
      %s143 = sphi 0, %s142
      %s159 = sphi 0, %s143
    $region4: #{tpu_custom_call.1} parent=1 // loop_header_branch
      %22 = sbr.rel (%p20) target = $region8
    $region5: #{tpu_custom_call.1} parent=1 // loop_body
      %s24 = ssub.s32 %s19, 1
      %s25 = ssub.s32 %s19, 2
      %s26 = sadd.s32 %s19, 1
      %s27 = ssub.s32 %s19, %s26
      %p28 = scmp.eq.s32.totalorder %s27, 0
      %s30 = sadd.s32 %s29, 1
      %s31 = scalar_select %p28, %s29, %s30
      %p34 = pneg %p28
      %p35 = scmp.eq.s32.totalorder %s19, 1
      %p36 = por %p34, %p35
      %p37 = scmp.ne.s32.totalorder %s29, %s32
      %p38 = scmp.eq.s32.totalorder %s19, 0
      %p39 = por %p37, %p38
      %p40 = scmp.ne.s32.totalorder %s29, %s32
      %p41 = scmp.eq.s32.totalorder %s24, 1
      %p42 = por %p40, %p41
      %p43 = scmp.ne.s32.totalorder %s32, %s33
      %p44 = scmp.eq.s32.totalorder %s24, 0
      %p45 = por %p43, %p44
      %p46 = scmp.ne.s32.totalorder %s32, %s33
      %p47 = scmp.eq.s32.totalorder %s25, 1
      %p48 = por %p46, %p47
      %p50 = scmp.ne.s32.totalorder %s33, %s49
      %p51 = scmp.eq.s32.totalorder %s25, 0
      %p52 = por %p50, %p51
      %s54 = sadd.s32 %s53, 1
      %p57 = scmp.eq.s32.totalorder %s19, 1
      %p58 = scmp.ne.s32.totalorder %s53, %s55
      %p59 = scmp.eq.s32.totalorder %s19, 0
      %p60 = por %p58, %p59
      %p61 = scmp.ne.s32.totalorder %s53, %s55
      %p62 = scmp.eq.s32.totalorder %s24, 1
      %p63 = por %p61, %p62
      %p64 = scmp.ne.s32.totalorder %s55, %s56
      %p65 = scmp.eq.s32.totalorder %s24, 0
      %p66 = por %p64, %p65
      %p67 = scmp.ne.s32.totalorder %s55, %s56
      %p68 = scmp.eq.s32.totalorder %s25, 1
      %p69 = por %p67, %p68
      %p71 = scmp.ne.s32.totalorder %s56, %s70
      %p72 = scmp.eq.s32.totalorder %s25, 0
      %p73 = por %p71, %p72
      %s75 = sadd.s32 %s74, 1
      %p78 = scmp.eq.s32.totalorder %s19, 1
      %p79 = scmp.ne.s32.totalorder %s74, %s76
      %p80 = scmp.eq.s32.totalorder %s19, 0
      %p81 = por %p79, %p80
      %p82 = scmp.ne.s32.totalorder %s74, %s76
      %p83 = scmp.eq.s32.totalorder %s24, 1
      %p84 = por %p82, %p83
      %p85 = scmp.ne.s32.totalorder %s76, %s77
      %p86 = scmp.eq.s32.totalorder %s24, 0
      %p87 = por %p85, %p86
      %p88 = scmp.ne.s32.totalorder %s76, %s77
      %p89 = scmp.eq.s32.totalorder %s25, 1
      %p90 = por %p88, %p89
      %p92 = scmp.ne.s32.totalorder %s77, %s91
      %p93 = scmp.eq.s32.totalorder %s25, 0
      %p94 = por %p92, %p93
      %s96 = sadd.s32 %s95, 1
      %p99 = scmp.eq.s32.totalorder %s19, 1
      %p100 = scmp.ne.s32.totalorder %s95, %s97
      %p101 = scmp.eq.s32.totalorder %s19, 0
      %p102 = por %p100, %p101
      %p103 = scmp.ne.s32.totalorder %s95, %s97
      %p104 = scmp.eq.s32.totalorder %s24, 1
      %p105 = por %p103, %p104
      %p106 = scmp.ne.s32.totalorder %s97, %s98
      %p107 = scmp.eq.s32.totalorder %s24, 0
      %p108 = por %p106, %p107
      %p109 = scmp.ne.s32.totalorder %s97, %s98
      %p110 = scmp.eq.s32.totalorder %s25, 1
      %p111 = por %p109, %p110
      %p113 = scmp.ne.s32.totalorder %s98, %s112
      %p114 = scmp.eq.s32.totalorder %s25, 0
      %p115 = por %p113, %p114
      %s117 = sadd.s32 %s116, 1
      %p120 = scmp.eq.s32.totalorder %s19, 1
      %p121 = scmp.ne.s32.totalorder %s116, %s118
      %p122 = scmp.eq.s32.totalorder %s19, 0
      %p123 = por %p121, %p122
      %p124 = scmp.ne.s32.totalorder %s116, %s118
      %p125 = scmp.eq.s32.totalorder %s24, 1
      %p126 = por %p124, %p125
      %p127 = scmp.ne.s32.totalorder %s118, %s119
      %p128 = scmp.eq.s32.totalorder %s24, 0
      %p129 = por %p127, %p128
      %p130 = scmp.ne.s32.totalorder %s118, %s119
      %p131 = scmp.eq.s32.totalorder %s25, 1
      %p132 = por %p130, %p131
      %p134 = scmp.ne.s32.totalorder %s119, %s133
      %p135 = scmp.eq.s32.totalorder %s25, 0
      %p136 = por %p134, %p135
      %s137 = ssub.s32 %s19, %s26
      %p138 = scmp.eq.s32.totalorder %s137, 0
      %s140 = sadd.s32 %s139, 1
      %s141 = scalar_select %p138, %s139, %s140
      %p144 = pneg %p138
      %p145 = scmp.eq.s32.totalorder %s19, 1
      %p146 = por %p144, %p145
      %p147 = scmp.ne.s32.totalorder %s139, %s142
      %p148 = scmp.eq.s32.totalorder %s19, 0
      %p149 = por %p147, %p148
      %p150 = scmp.ne.s32.totalorder %s139, %s142
      %p151 = scmp.eq.s32.totalorder %s24, 1
      %p152 = por %p150, %p151
      %p153 = scmp.ne.s32.totalorder %s142, %s143
      %p154 = scmp.eq.s32.totalorder %s24, 0
      %p155 = por %p153, %p154
      %p156 = scmp.ne.s32.totalorder %s142, %s143
      %p157 = scmp.eq.s32.totalorder %s25, 1
      %p158 = por %p156, %p157
      %p160 = scmp.ne.s32.totalorder %s143, %s159
      %p161 = scmp.eq.s32.totalorder %s25, 0
      %p162 = por %p160, %p161
      %p163 = scmp.le.s32.totalorder 1, %s19
      %p164 = scmp.lt.s32.totalorder %s19, 3
      %p165 = pnand %p163, %p164
      %p166 = pneg %p165
      // Predicated region
      $region9: #{tpu_custom_call.1} parent=5 // pred_check
        _
      $region10: #{tpu_custom_call.1} parent=5 // pred_check_branch
        %168 = sbr.rel (%p165) target = $region12
      $region11: #{tpu_custom_call.1} parent=5 // pred_region
        %s169 = ssub.s32 %s19, 1
        // Predicated region
        $region13: #{tpu_custom_call.1} parent=11 // pred_check
          %p170 = pneg %p66
        $region14: #{tpu_custom_call.1} parent=11 // pred_check_branch
          %172 = sbr.rel (%p170) target = $region16
        $region15: #{tpu_custom_call.1} parent=11 // pred_region
          %174 = vsyncadd [#allocation6], 0
          %s175 = sshll.u32 %s1, 4
          %s176 = int_to_ptr.hbm [resolvable:$true] %s175
          %s177 = sshll.u32 [#allocation5], 4
          %s178 = int_to_ptr.vmem [resolvable:$true] %s177
          %183 = dma.hbm_to_vmem [thread:$0]  %s176, 8192, %s178, [#allocation6], 128, 128, 8
        $region16: #{tpu_custom_call.1} parent=11 // pred_fallthru
          _
        // Predicated region
        $region17: #{tpu_custom_call.1} parent=11 // pred_check
          %p184 = pneg %p87
        $region18: #{tpu_custom_call.1} parent=11 // pred_check_branch
          %186 = sbr.rel (%p184) target = $region20
        $region19: #{tpu_custom_call.1} parent=11 // pred_region
          %188 = vsyncadd [#allocation6], 0
          %s190 = sshll.u32 %s2, 4
          %s191 = int_to_ptr.hbm [resolvable:$true] %s190
          %s192 = sshll.u32 [#allocation7], 4
          %s193 = int_to_ptr.vmem [resolvable:$true] %s192
          %195 = dma.hbm_to_vmem [thread:$0]  %s191, 32, %s193, [#allocation6]
        $region20: #{tpu_custom_call.1} parent=11 // pred_fallthru
          _
        // Predicated region
        $region21: #{tpu_custom_call.1} parent=11 // pred_check
          %p196 = pneg %p108
        $region22: #{tpu_custom_call.1} parent=11 // pred_check_branch
          %198 = sbr.rel (%p196) target = $region24
        $region23: #{tpu_custom_call.1} parent=11 // pred_region
          %200 = vsyncadd [#allocation9], 0
          %s201 = sshll.u32 %s3, 4
          %s202 = int_to_ptr.hbm [resolvable:$true] %s201
          %s203 = sshll.u32 [#allocation8], 4
          %s204 = int_to_ptr.vmem [resolvable:$true] %s203
          %209 = dma.hbm_to_vmem [thread:$0]  %s202, 2048, %s204, [#allocation9], 64, 64, 4
        $region24: #{tpu_custom_call.1} parent=11 // pred_fallthru
          _
        // Predicated region
        $region25: #{tpu_custom_call.1} parent=11 // pred_check
          %p210 = pneg %p129
        $region26: #{tpu_custom_call.1} parent=11 // pred_check_branch
          %212 = sbr.rel (%p210) target = $region28
        $region27: #{tpu_custom_call.1} parent=11 // pred_region
          _
        $region28: #{tpu_custom_call.1} parent=11 // pred_fallthru
          _
      $region12: #{tpu_custom_call.1} parent=5 // pred_fallthru
        _
      %p213 = scmp.lt.s32.totalorder %s19, 2
      // Predicated region
      $region29: #{tpu_custom_call.1} parent=5 // pred_check
        %p214 = pneg %p213
      $region30: #{tpu_custom_call.1} parent=5 // pred_check_branch
        %216 = sbr.rel (%p214) target = $region32
      $region31: #{tpu_custom_call.1} parent=5 // pred_region
        // Predicated region
        $region33: #{tpu_custom_call.1} parent=31 // pred_check
          %p217 = pneg %p39
        $region34: #{tpu_custom_call.1} parent=31 // pred_check_branch
          %219 = sbr.rel (%p217) target = $region36
        $region35: #{tpu_custom_call.1} parent=31 // pred_region
          %s220 = sand.u32 %s29, 1
          %s221 = scalar_lea.sflag [#allocation3], %s220
          %s222 = sand.u32 %s29, 1
          %s223 = smul.addr %s222, 512
          %s224 = scalar_lea.vmem [#allocation2], %s223
          %s225 = smul.u32 16, %s19
          %227 = vsyncadd %s221, 0
          %s228 = smul.addr %s225, 4
          %s229 = smul.addr %s228, 8
          %s230 = scalar_lea.hbm %s0, %s229
          %s231 = sshll.u32 %s230, 4
          %s232 = int_to_ptr.hbm [resolvable:$true] %s231
          %s233 = sshll.u32 %s224, 4
          %s234 = int_to_ptr.vmem [resolvable:$true] %s233
          %239 = dma.hbm_to_vmem [thread:$0]  %s232, 8192, %s234, %s221, 512, 512, 32
        $region36: #{tpu_custom_call.1} parent=31 // pred_fallthru
          _
      $region32: #{tpu_custom_call.1} parent=5 // pred_fallthru
        _
      %p240 = scmp.le.s32.totalorder 1, %s19
      %p241 = scmp.lt.s32.totalorder %s19, 3
      %p242 = pnand %p240, %p241
      %p243 = pneg %p242
      // Predicated region
      $region37: #{tpu_custom_call.1} parent=5 // pred_check
        _
      $region38: #{tpu_custom_call.1} parent=5 // pred_check_branch
        %245 = sbr.rel (%p242) target = $region40
      $region39: #{tpu_custom_call.1} parent=5 // pred_region
        %s246 = ssub.s32 %s19, 1
        %s247 = sand.u32 %s32, 1
        %s248 = scalar_lea.sflag [#allocation3], %s247
        %s249 = sand.u32 %s32, 1
        %s250 = smul.addr %s249, 512
        %s251 = scalar_lea.vmem [#allocation2], %s250
        // Predicated region
        $region41: #{tpu_custom_call.1} parent=39 // pred_check
          %p252 = pneg %p45
        $region42: #{tpu_custom_call.1} parent=39 // pred_check_branch
          %254 = sbr.rel (%p252) target = $region44
        $region43: #{tpu_custom_call.1} parent=39 // pred_region
          %256 = dma.done %s248, 8192
        $region44: #{tpu_custom_call.1} parent=39 // pred_fallthru
          _
        // Predicated region
        $region45: #{tpu_custom_call.1} parent=39 // pred_check
          %p257 = pneg %p66
        $region46: #{tpu_custom_call.1} parent=39 // pred_check_branch
          %259 = sbr.rel (%p257) target = $region48
        $region47: #{tpu_custom_call.1} parent=39 // pred_region
          %261 = dma.done [#allocation6], 8192
        $region48: #{tpu_custom_call.1} parent=39 // pred_fallthru
          _
        // Predicated region
        $region49: #{tpu_custom_call.1} parent=39 // pred_check
          %p262 = pneg %p87
        $region50: #{tpu_custom_call.1} parent=39 // pred_check_branch
          %264 = sbr.rel (%p262) target = $region52
        $region51: #{tpu_custom_call.1} parent=39 // pred_region
          %266 = dma.done [#allocation6], 32
        $region52: #{tpu_custom_call.1} parent=39 // pred_fallthru
          _
        // Predicated region
        $region53: #{tpu_custom_call.1} parent=39 // pred_check
          %p267 = pneg %p108
        $region54: #{tpu_custom_call.1} parent=39 // pred_check_branch
          %269 = sbr.rel (%p267) target = $region56
        $region55: #{tpu_custom_call.1} parent=39 // pred_region
          %271 = dma.done [#allocation9], 2048
        $region56: #{tpu_custom_call.1} parent=39 // pred_fallthru
          _
        %s272 = sand.u32 %s32, 1
        %s273 = scalar_lea.sflag [#allocation3], %s272
        %s274 = sand.u32 %s32, 1
        %s275 = smul.addr %s274, 512
        %s276 = scalar_lea.vmem [#allocation2], %s275
        %p277 = pneg %p45
        %p278 = pneg %p42
        %p279 = pneg %p66
        %p280 = pneg %p63
        %p281 = pneg %p87
        %p282 = pneg %p84
        %p283 = pneg %p108
        %p284 = pneg %p105
        %p285 = pneg %p129
        %p286 = pneg %p126
        %p287 = pneg %p155
        %p288 = pneg %p152
        %s289 = sand.u32 %s142, 1
        %s290 = scalar_lea.sflag [#allocation4], %s289
        %s291 = sand.u32 %s142, 1
        %s292 = smul.addr %s291, 128
        %s293 = scalar_lea.vmem [#allocation10], %s292
        %s294 = smul.u32 16, %s24
        %s295 = smul.u32 16, %s24
        %v296 = vld [vmem:[%s251] sm:$0xff]
        %v297 = vld [vmem:[%s251 + $0x8] sm:$0xff]
        %v298 = vld [vmem:[%s251 + $0x10] sm:$0xff]
        %v299 = vld [vmem:[%s251 + $0x18] sm:$0xff]
        %v300 = vld [vmem:[%s251 + $0x20] sm:$0xff]
        %v301 = vld [vmem:[%s251 + $0x28] sm:$0xff]
        %v302 = vld [vmem:[%s251 + $0x30] sm:$0xff]
        %v303 = vld [vmem:[%s251 + $0x38] sm:$0xff]
        %v304 = vld [vmem:[%s251 + $0x40] sm:$0xff]
        %v305 = vld [vmem:[%s251 + $0x48] sm:$0xff]
        %v306 = vld [vmem:[%s251 + $0x50] sm:$0xff]
        %v307 = vld [vmem:[%s251 + $0x58] sm:$0xff]
        %v308 = vld [vmem:[%s251 + $0x60] sm:$0xff]
        %v309 = vld [vmem:[%s251 + $0x68] sm:$0xff]
        %v310 = vld [vmem:[%s251 + $0x70] sm:$0xff]
        %v311 = vld [vmem:[%s251 + $0x78] sm:$0xff]
        %v312 = vld [vmem:[%s251 + $0x80] sm:$0xff]
        %v313 = vld [vmem:[%s251 + $0x88] sm:$0xff]
        %v314 = vld [vmem:[%s251 + $0x90] sm:$0xff]
        %v315 = vld [vmem:[%s251 + $0x98] sm:$0xff]
        %v316 = vld [vmem:[%s251 + $0xa0] sm:$0xff]
        %v317 = vld [vmem:[%s251 + $0xa8] sm:$0xff]
        %v318 = vld [vmem:[%s251 + $0xb0] sm:$0xff]
        %v319 = vld [vmem:[%s251 + $0xb8] sm:$0xff]
        %v320 = vld [vmem:[%s251 + $0xc0] sm:$0xff]
        %v321 = vld [vmem:[%s251 + $0xc8] sm:$0xff]
        %v322 = vld [vmem:[%s251 + $0xd0] sm:$0xff]
        %v323 = vld [vmem:[%s251 + $0xd8] sm:$0xff]
        %v324 = vld [vmem:[%s251 + $0xe0] sm:$0xff]
        %v325 = vld [vmem:[%s251 + $0xe8] sm:$0xff]
        %v326 = vld [vmem:[%s251 + $0xf0] sm:$0xff]
        %v327 = vld [vmem:[%s251 + $0xf8] sm:$0xff]
        %v328 = vld [vmem:[%s251 + $0x100] sm:$0xff]
        %v329 = vld [vmem:[%s251 + $0x108] sm:$0xff]
        %v330 = vld [vmem:[%s251 + $0x110] sm:$0xff]
        %v331 = vld [vmem:[%s251 + $0x118] sm:$0xff]
        %v332 = vld [vmem:[%s251 + $0x120] sm:$0xff]
        %v333 = vld [vmem:[%s251 + $0x128] sm:$0xff]
        %v334 = vld [vmem:[%s251 + $0x130] sm:$0xff]
        %v335 = vld [vmem:[%s251 + $0x138] sm:$0xff]
        %v336 = vld [vmem:[%s251 + $0x140] sm:$0xff]
        %v337 = vld [vmem:[%s251 + $0x148] sm:$0xff]
        %v338 = vld [vmem:[%s251 + $0x150] sm:$0xff]
        %v339 = vld [vmem:[%s251 + $0x158] sm:$0xff]
        %v340 = vld [vmem:[%s251 + $0x160] sm:$0xff]
        %v341 = vld [vmem:[%s251 + $0x168] sm:$0xff]
        %v342 = vld [vmem:[%s251 + $0x170] sm:$0xff]
        %v343 = vld [vmem:[%s251 + $0x178] sm:$0xff]
        %v344 = vld [vmem:[%s251 + $0x180] sm:$0xff]
        %v345 = vld [vmem:[%s251 + $0x188] sm:$0xff]
        %v346 = vld [vmem:[%s251 + $0x190] sm:$0xff]
        %v347 = vld [vmem:[%s251 + $0x198] sm:$0xff]
        %v348 = vld [vmem:[%s251 + $0x1a0] sm:$0xff]
        %v349 = vld [vmem:[%s251 + $0x1a8] sm:$0xff]
        %v350 = vld [vmem:[%s251 + $0x1b0] sm:$0xff]
        %v351 = vld [vmem:[%s251 + $0x1b8] sm:$0xff]
        %v352 = vld [vmem:[%s251 + $0x1c0] sm:$0xff]
        %v353 = vld [vmem:[%s251 + $0x1c8] sm:$0xff]
        %v354 = vld [vmem:[%s251 + $0x1d0] sm:$0xff]
        %v355 = vld [vmem:[%s251 + $0x1d8] sm:$0xff]
        %v356 = vld [vmem:[%s251 + $0x1e0] sm:$0xff]
        %v357 = vld [vmem:[%s251 + $0x1e8] sm:$0xff]
        %v358 = vld [vmem:[%s251 + $0x1f0] sm:$0xff]
        %v359 = vld [vmem:[%s251 + $0x1f8] sm:$0xff]
        %v360 = vpack.c.bf16 %v300, %v296
        %v361 = vpack.c.bf16 %v301, %v297
        %v362 = vpack.c.bf16 %v302, %v298
        %v363 = vpack.c.bf16 %v303, %v299
        %v364 = vpack.c.bf16 %v308, %v304
        %v365 = vpack.c.bf16 %v309, %v305
        %v366 = vpack.c.bf16 %v310, %v306
        %v367 = vpack.c.bf16 %v311, %v307
        %v368 = vpack.c.bf16 %v316, %v312
        %v369 = vpack.c.bf16 %v317, %v313
        %v370 = vpack.c.bf16 %v318, %v314
        %v371 = vpack.c.bf16 %v319, %v315
        %v372 = vpack.c.bf16 %v324, %v320
        %v373 = vpack.c.bf16 %v325, %v321
        %v374 = vpack.c.bf16 %v326, %v322
        %v375 = vpack.c.bf16 %v327, %v323
        %v376 = vpack.c.bf16 %v332, %v328
        %v377 = vpack.c.bf16 %v333, %v329
        %v378 = vpack.c.bf16 %v334, %v330
        %v379 = vpack.c.bf16 %v335, %v331
        %v380 = vpack.c.bf16 %v340, %v336
        %v381 = vpack.c.bf16 %v341, %v337
        %v382 = vpack.c.bf16 %v342, %v338
        %v383 = vpack.c.bf16 %v343, %v339
        %v384 = vpack.c.bf16 %v348, %v344
        %v385 = vpack.c.bf16 %v349, %v345
        %v386 = vpack.c.bf16 %v350, %v346
        %v387 = vpack.c.bf16 %v351, %v347
        %v388 = vpack.c.bf16 %v356, %v352
        %v389 = vpack.c.bf16 %v357, %v353
        %v390 = vpack.c.bf16 %v358, %v354
        %v391 = vpack.c.bf16 %v359, %v355
        %v392 = vld [vmem:[#allocation5] sm:$0xff]
        %v393 = vld [vmem:[#allocation5 + $0x8] sm:$0xff]
        %v394 = vld [vmem:[#allocation5 + $0x10] sm:$0xff]
        %v395 = vld [vmem:[#allocation5 + $0x18] sm:$0xff]
        %v396 = vld [vmem:[#allocation5 + $0x20] sm:$0xff]
        %v397 = vld [vmem:[#allocation5 + $0x28] sm:$0xff]
        %v398 = vld [vmem:[#allocation5 + $0x30] sm:$0xff]
        %v399 = vld [vmem:[#allocation5 + $0x38] sm:$0xff]
        %v400 = vld [vmem:[#allocation5 + $0x40] sm:$0xff]
        %v401 = vld [vmem:[#allocation5 + $0x48] sm:$0xff]
        %v402 = vld [vmem:[#allocation5 + $0x50] sm:$0xff]
        %v403 = vld [vmem:[#allocation5 + $0x58] sm:$0xff]
        %v404 = vld [vmem:[#allocation5 + $0x60] sm:$0xff]
        %v405 = vld [vmem:[#allocation5 + $0x68] sm:$0xff]
        %v406 = vld [vmem:[#allocation5 + $0x70] sm:$0xff]
        %v407 = vld [vmem:[#allocation5 + $0x78] sm:$0xff]
        %v408 = vld [vmem:[#allocation5 + $0x80] sm:$0xff]
        %v409 = vld [vmem:[#allocation5 + $0x88] sm:$0xff]
        %v410 = vld [vmem:[#allocation5 + $0x90] sm:$0xff]
        %v411 = vld [vmem:[#allocation5 + $0x98] sm:$0xff]
        %v412 = vld [vmem:[#allocation5 + $0xa0] sm:$0xff]
        %v413 = vld [vmem:[#allocation5 + $0xa8] sm:$0xff]
        %v414 = vld [vmem:[#allocation5 + $0xb0] sm:$0xff]
        %v415 = vld [vmem:[#allocation5 + $0xb8] sm:$0xff]
        %v416 = vld [vmem:[#allocation5 + $0xc0] sm:$0xff]
        %v417 = vld [vmem:[#allocation5 + $0xc8] sm:$0xff]
        %v418 = vld [vmem:[#allocation5 + $0xd0] sm:$0xff]
        %v419 = vld [vmem:[#allocation5 + $0xd8] sm:$0xff]
        %v420 = vld [vmem:[#allocation5 + $0xe0] sm:$0xff]
        %v421 = vld [vmem:[#allocation5 + $0xe8] sm:$0xff]
        %v422 = vld [vmem:[#allocation5 + $0xf0] sm:$0xff]
        %v423 = vld [vmem:[#allocation5 + $0xf8] sm:$0xff]
        %v424 = vld [vmem:[#allocation5 + $0x100] sm:$0xff]
        %v425 = vld [vmem:[#allocation5 + $0x108] sm:$0xff]
        %v426 = vld [vmem:[#allocation5 + $0x110] sm:$0xff]
        %v427 = vld [vmem:[#allocation5 + $0x118] sm:$0xff]
        %v428 = vld [vmem:[#allocation5 + $0x120] sm:$0xff]
        %v429 = vld [vmem:[#allocation5 + $0x128] sm:$0xff]
        %v430 = vld [vmem:[#allocation5 + $0x130] sm:$0xff]
        %v431 = vld [vmem:[#allocation5 + $0x138] sm:$0xff]
        %v432 = vld [vmem:[#allocation5 + $0x140] sm:$0xff]
        %v433 = vld [vmem:[#allocation5 + $0x148] sm:$0xff]
        %v434 = vld [vmem:[#allocation5 + $0x150] sm:$0xff]
        %v435 = vld [vmem:[#allocation5 + $0x158] sm:$0xff]
        %v436 = vld [vmem:[#allocation5 + $0x160] sm:$0xff]
        %v437 = vld [vmem:[#allocation5 + $0x168] sm:$0xff]
        %v438 = vld [vmem:[#allocation5 + $0x170] sm:$0xff]
        %v439 = vld [vmem:[#allocation5 + $0x178] sm:$0xff]
        %v440 = vld [vmem:[#allocation5 + $0x180] sm:$0xff]
        %v441 = vld [vmem:[#allocation5 + $0x188] sm:$0xff]
        %v442 = vld [vmem:[#allocation5 + $0x190] sm:$0xff]
        %v443 = vld [vmem:[#allocation5 + $0x198] sm:$0xff]
        %v444 = vld [vmem:[#allocation5 + $0x1a0] sm:$0xff]
        %v445 = vld [vmem:[#allocation5 + $0x1a8] sm:$0xff]
        %v446 = vld [vmem:[#allocation5 + $0x1b0] sm:$0xff]
        %v447 = vld [vmem:[#allocation5 + $0x1b8] sm:$0xff]
        %v448 = vld [vmem:[#allocation5 + $0x1c0] sm:$0xff]
        %v449 = vld [vmem:[#allocation5 + $0x1c8] sm:$0xff]
        %v450 = vld [vmem:[#allocation5 + $0x1d0] sm:$0xff]
        %v451 = vld [vmem:[#allocation5 + $0x1d8] sm:$0xff]
        %v452 = vld [vmem:[#allocation5 + $0x1e0] sm:$0xff]
        %v453 = vld [vmem:[#allocation5 + $0x1e8] sm:$0xff]
        %v454 = vld [vmem:[#allocation5 + $0x1f0] sm:$0xff]
        %v455 = vld [vmem:[#allocation5 + $0x1f8] sm:$0xff]
        %v456 = vld [vmem:[#allocation7] sm:$0x3]
        %v458 = vperm.slane %v456, 0
        %v459 = vperm.slane %v456, 1
        %v526 = vunpack.c.l.b16 %v392
        %v527 = vunpack.c.h.b16 %v392
        %v528 = vunpack.c.l.b16 %v393
        %v529 = vunpack.c.h.b16 %v393
        %v530 = vunpack.c.l.b16 %v394
        %v531 = vunpack.c.h.b16 %v394
        %v532 = vunpack.c.l.b16 %v395
        %v533 = vunpack.c.h.b16 %v395
        %v534 = vunpack.c.l.b16 %v396
        %v535 = vunpack.c.h.b16 %v396
        %v536 = vunpack.c.l.b16 %v397
        %v537 = vunpack.c.h.b16 %v397
        %v538 = vunpack.c.l.b16 %v398
        %v539 = vunpack.c.h.b16 %v398
        %v540 = vunpack.c.l.b16 %v399
        %v541 = vunpack.c.h.b16 %v399
        %v542 = vunpack.c.l.b16 %v400
        %v543 = vunpack.c.h.b16 %v400
        %v544 = vunpack.c.l.b16 %v401
        %v545 = vunpack.c.h.b16 %v401
        %v546 = vunpack.c.l.b16 %v402
        %v547 = vunpack.c.h.b16 %v402
        %v548 = vunpack.c.l.b16 %v403
        %v549 = vunpack.c.h.b16 %v403
        %v550 = vunpack.c.l.b16 %v404
        %v551 = vunpack.c.h.b16 %v404
        %v552 = vunpack.c.l.b16 %v405
        %v553 = vunpack.c.h.b16 %v405
        %v554 = vunpack.c.l.b16 %v406
        %v555 = vunpack.c.h.b16 %v406
        %v556 = vunpack.c.l.b16 %v407
        %v557 = vunpack.c.h.b16 %v407
        %v558 = vunpack.c.l.b16 %v408
        %v559 = vunpack.c.h.b16 %v408
        %v560 = vunpack.c.l.b16 %v409
        %v561 = vunpack.c.h.b16 %v409
        %v562 = vunpack.c.l.b16 %v410
        %v563 = vunpack.c.h.b16 %v410
        %v564 = vunpack.c.l.b16 %v411
        %v565 = vunpack.c.h.b16 %v411
        %v566 = vunpack.c.l.b16 %v412
        %v567 = vunpack.c.h.b16 %v412
        %v568 = vunpack.c.l.b16 %v413
        %v569 = vunpack.c.h.b16 %v413
        %v570 = vunpack.c.l.b16 %v414
        %v571 = vunpack.c.h.b16 %v414
        %v572 = vunpack.c.l.b16 %v415
        %v573 = vunpack.c.h.b16 %v415
        %v574 = vunpack.c.l.b16 %v416
        %v575 = vunpack.c.h.b16 %v416
        %v576 = vunpack.c.l.b16 %v417
        %v577 = vunpack.c.h.b16 %v417
        %v578 = vunpack.c.l.b16 %v418
        %v579 = vunpack.c.h.b16 %v418
        %v580 = vunpack.c.l.b16 %v419
        %v581 = vunpack.c.h.b16 %v419
        %v582 = vunpack.c.l.b16 %v420
        %v583 = vunpack.c.h.b16 %v420
        %v584 = vunpack.c.l.b16 %v421
        %v585 = vunpack.c.h.b16 %v421
        %v586 = vunpack.c.l.b16 %v422
        %v587 = vunpack.c.h.b16 %v422
        %v588 = vunpack.c.l.b16 %v423
        %v589 = vunpack.c.h.b16 %v423
        %v590 = vunpack.c.l.b16 %v424
        %v591 = vunpack.c.h.b16 %v424
        %v592 = vunpack.c.l.b16 %v425
        %v593 = vunpack.c.h.b16 %v425
        %v594 = vunpack.c.l.b16 %v426
        %v595 = vunpack.c.h.b16 %v426
        %v596 = vunpack.c.l.b16 %v427
        %v597 = vunpack.c.h.b16 %v427
        %v598 = vunpack.c.l.b16 %v428
        %v599 = vunpack.c.h.b16 %v428
        %v600 = vunpack.c.l.b16 %v429
        %v601 = vunpack.c.h.b16 %v429
        %v602 = vunpack.c.l.b16 %v430
        %v603 = vunpack.c.h.b16 %v430
        %v604 = vunpack.c.l.b16 %v431
        %v605 = vunpack.c.h.b16 %v431
        %v606 = vunpack.c.l.b16 %v432
        %v607 = vunpack.c.h.b16 %v432
        %v608 = vunpack.c.l.b16 %v433
        %v609 = vunpack.c.h.b16 %v433
        %v610 = vunpack.c.l.b16 %v434
        %v611 = vunpack.c.h.b16 %v434
        %v612 = vunpack.c.l.b16 %v435
        %v613 = vunpack.c.h.b16 %v435
        %v614 = vunpack.c.l.b16 %v436
        %v615 = vunpack.c.h.b16 %v436
        %v616 = vunpack.c.l.b16 %v437
        %v617 = vunpack.c.h.b16 %v437
        %v618 = vunpack.c.l.b16 %v438
        %v619 = vunpack.c.h.b16 %v438
        %v620 = vunpack.c.l.b16 %v439
        %v621 = vunpack.c.h.b16 %v439
        %v622 = vunpack.c.l.b16 %v440
        %v623 = vunpack.c.h.b16 %v440
        %v624 = vunpack.c.l.b16 %v441
        %v625 = vunpack.c.h.b16 %v441
        %v626 = vunpack.c.l.b16 %v442
        %v627 = vunpack.c.h.b16 %v442
        %v628 = vunpack.c.l.b16 %v443
        %v629 = vunpack.c.h.b16 %v443
        %v630 = vunpack.c.l.b16 %v444
        %v631 = vunpack.c.h.b16 %v444
        %v632 = vunpack.c.l.b16 %v445
        %v633 = vunpack.c.h.b16 %v445
        %v634 = vunpack.c.l.b16 %v446
        %v635 = vunpack.c.h.b16 %v446
        %v636 = vunpack.c.l.b16 %v447
        %v637 = vunpack.c.h.b16 %v447
        %v638 = vunpack.c.l.b16 %v448
        %v639 = vunpack.c.h.b16 %v448
        %v640 = vunpack.c.l.b16 %v449
        %v641 = vunpack.c.h.b16 %v449
        %v642 = vunpack.c.l.b16 %v450
        %v643 = vunpack.c.h.b16 %v450
        %v644 = vunpack.c.l.b16 %v451
        %v645 = vunpack.c.h.b16 %v451
        %v646 = vunpack.c.l.b16 %v452
        %v647 = vunpack.c.h.b16 %v452
        %v648 = vunpack.c.l.b16 %v453
        %v649 = vunpack.c.h.b16 %v453
        %v650 = vunpack.c.l.b16 %v454
        %v651 = vunpack.c.h.b16 %v454
        %v652 = vunpack.c.l.b16 %v455
        %v653 = vunpack.c.h.b16 %v455
        %v654 = vpack.c.b16 %v528, %v526
        %v655 = vpack.c.b16 %v529, %v527
        %v656 = vpack.c.b16 %v532, %v530
        %v657 = vpack.c.b16 %v533, %v531
        %v658 = vpack.c.b16 %v536, %v534
        %v659 = vpack.c.b16 %v537, %v535
        %v660 = vpack.c.b16 %v540, %v538
        %v661 = vpack.c.b16 %v541, %v539
        %v662 = vpack.c.b16 %v544, %v542
        %v663 = vpack.c.b16 %v545, %v543
        %v664 = vpack.c.b16 %v548, %v546
        %v665 = vpack.c.b16 %v549, %v547
        %v666 = vpack.c.b16 %v552, %v550
        %v667 = vpack.c.b16 %v553, %v551
        %v668 = vpack.c.b16 %v556, %v554
        %v669 = vpack.c.b16 %v557, %v555
        %v670 = vpack.c.b16 %v560, %v558
        %v671 = vpack.c.b16 %v561, %v559
        %v672 = vpack.c.b16 %v564, %v562
        %v673 = vpack.c.b16 %v565, %v563
        %v674 = vpack.c.b16 %v568, %v566
        %v675 = vpack.c.b16 %v569, %v567
        %v676 = vpack.c.b16 %v572, %v570
        %v677 = vpack.c.b16 %v573, %v571
        %v678 = vpack.c.b16 %v576, %v574
        %v679 = vpack.c.b16 %v577, %v575
        %v680 = vpack.c.b16 %v580, %v578
        %v681 = vpack.c.b16 %v581, %v579
        %v682 = vpack.c.b16 %v584, %v582
        %v683 = vpack.c.b16 %v585, %v583
        %v684 = vpack.c.b16 %v588, %v586
        %v685 = vpack.c.b16 %v589, %v587
        %v686 = vpack.c.b16 %v592, %v590
        %v687 = vpack.c.b16 %v593, %v591
        %v688 = vpack.c.b16 %v596, %v594
        %v689 = vpack.c.b16 %v597, %v595
        %v690 = vpack.c.b16 %v600, %v598
        %v691 = vpack.c.b16 %v601, %v599
        %v692 = vpack.c.b16 %v604, %v602
        %v693 = vpack.c.b16 %v605, %v603
        %v694 = vpack.c.b16 %v608, %v606
        %v695 = vpack.c.b16 %v609, %v607
        %v696 = vpack.c.b16 %v612, %v610
        %v697 = vpack.c.b16 %v613, %v611
        %v698 = vpack.c.b16 %v616, %v614
        %v699 = vpack.c.b16 %v617, %v615
        %v700 = vpack.c.b16 %v620, %v618
        %v701 = vpack.c.b16 %v621, %v619
        %v702 = vpack.c.b16 %v624, %v622
        %v703 = vpack.c.b16 %v625, %v623
        %v704 = vpack.c.b16 %v628, %v626
        %v705 = vpack.c.b16 %v629, %v627
        %v706 = vpack.c.b16 %v632, %v630
        %v707 = vpack.c.b16 %v633, %v631
        %v708 = vpack.c.b16 %v636, %v634
        %v709 = vpack.c.b16 %v637, %v635
        %v710 = vpack.c.b16 %v640, %v638
        %v711 = vpack.c.b16 %v641, %v639
        %v712 = vpack.c.b16 %v644, %v642
        %v713 = vpack.c.b16 %v645, %v643
        %v714 = vpack.c.b16 %v648, %v646
        %v715 = vpack.c.b16 %v649, %v647
        %v716 = vpack.c.b16 %v652, %v650
        %v717 = vpack.c.b16 %v653, %v651
        %782 = vmatpush.bf16.msra.mxu0 %v668
        %783 = vmatpush.bf16.msra.mxu0 %v666
        %784 = vmatpush.bf16.msra.mxu0 %v664
        %785 = vmatpush.bf16.msra.mxu0 %v662
        %786 = vmatpush.bf16.msra.mxu0 %v660
        %787 = vmatpush.bf16.msra.mxu0 %v658
        %788 = vmatpush.bf16.msra.mxu0 %v656
        %789 = vmatpush.bf16.msra.mxu0 %v654
        %790 = vmatmul.bf16.gmra.mxu0 %v360
        %v791 = vpop.f32.mrf.mxu0
        %v792 = vadd.f32 %v458, %v791
        %v793 = vpop.f32.mrf.mxu0
        %v794 = vadd.f32 %v458, %v793
        %795 = vmatmul.bf16.gmra.mxu0 %v364
        %v796 = vpop.f32.mrf.mxu0
        %v797 = vadd.f32 %v458, %v796
        %v798 = vpop.f32.mrf.mxu0
        %v799 = vadd.f32 %v458, %v798
        %800 = vmatmul.bf16.gmra.mxu0 %v368
        %v801 = vpop.f32.mrf.mxu0
        %v802 = vadd.f32 %v458, %v801
        %v803 = vpop.f32.mrf.mxu0
        %v804 = vadd.f32 %v458, %v803
        %805 = vmatmul.bf16.gmra.mxu0 %v372
        %v806 = vpop.f32.mrf.mxu0
        %v807 = vadd.f32 %v458, %v806
        %v808 = vpop.f32.mrf.mxu0
        %v809 = vadd.f32 %v458, %v808
        %810 = vmatmul.bf16.gmra.mxu0 %v376
        %v811 = vpop.f32.mrf.mxu0
        %v812 = vadd.f32 %v458, %v811
        %v813 = vpop.f32.mrf.mxu0
        %v814 = vadd.f32 %v458, %v813
        %815 = vmatmul.bf16.gmra.mxu0 %v380
        %v816 = vpop.f32.mrf.mxu0
        %v817 = vadd.f32 %v458, %v816
        %v818 = vpop.f32.mrf.mxu0
        %v819 = vadd.f32 %v458, %v818
        %820 = vmatmul.bf16.gmra.mxu0 %v384
        %v821 = vpop.f32.mrf.mxu0
        %v822 = vadd.f32 %v458, %v821
        %v823 = vpop.f32.mrf.mxu0
        %v824 = vadd.f32 %v458, %v823
        %825 = vmatmul.bf16.gmra.mxu0 %v388
        %v826 = vpop.f32.mrf.mxu0
        %v827 = vadd.f32 %v458, %v826
        %v828 = vpop.f32.mrf.mxu0
        %v829 = vadd.f32 %v458, %v828
        %830 = vdwg.mxu0
        %831 = vmatpush.bf16.msra.mxu0 %v684
        %832 = vmatpush.bf16.msra.mxu0 %v682
        %833 = vmatpush.bf16.msra.mxu0 %v680
        %834 = vmatpush.bf16.msra.mxu0 %v678
        %835 = vmatpush.bf16.msra.mxu0 %v676
        %836 = vmatpush.bf16.msra.mxu0 %v674
        %837 = vmatpush.bf16.msra.mxu0 %v672
        %838 = vmatpush.bf16.msra.mxu0 %v670
        %839 = vmatmul.bf16.gmra.mxu0 %v361
        %v840 = vpop.f32.mrf.mxu0
        %v841 = vadd.f32 %v792, %v840
        %v842 = vpop.f32.mrf.mxu0
        %v843 = vadd.f32 %v794, %v842
        %844 = vmatmul.bf16.gmra.mxu0 %v365
        %v845 = vpop.f32.mrf.mxu0
        %v846 = vadd.f32 %v797, %v845
        %v847 = vpop.f32.mrf.mxu0
        %v848 = vadd.f32 %v799, %v847
        %849 = vmatmul.bf16.gmra.mxu0 %v369
        %v850 = vpop.f32.mrf.mxu0
        %v851 = vadd.f32 %v802, %v850
        %v852 = vpop.f32.mrf.mxu0
        %v853 = vadd.f32 %v804, %v852
        %854 = vmatmul.bf16.gmra.mxu0 %v373
        %v855 = vpop.f32.mrf.mxu0
        %v856 = vadd.f32 %v807, %v855
        %v857 = vpop.f32.mrf.mxu0
        %v858 = vadd.f32 %v809, %v857
        %859 = vmatmul.bf16.gmra.mxu0 %v377
        %v860 = vpop.f32.mrf.mxu0
        %v861 = vadd.f32 %v812, %v860
        %v862 = vpop.f32.mrf.mxu0
        %v863 = vadd.f32 %v814, %v862
        %864 = vmatmul.bf16.gmra.mxu0 %v381
        %v865 = vpop.f32.mrf.mxu0
        %v866 = vadd.f32 %v817, %v865
        %v867 = vpop.f32.mrf.mxu0
        %v868 = vadd.f32 %v819, %v867
        %869 = vmatmul.bf16.gmra.mxu0 %v385
        %v870 = vpop.f32.mrf.mxu0
        %v871 = vadd.f32 %v822, %v870
        %v872 = vpop.f32.mrf.mxu0
        %v873 = vadd.f32 %v824, %v872
        %874 = vmatmul.bf16.gmra.mxu0 %v389
        %v875 = vpop.f32.mrf.mxu0
        %v876 = vadd.f32 %v827, %v875
        %v877 = vpop.f32.mrf.mxu0
        %v878 = vadd.f32 %v829, %v877
        %879 = vdwg.mxu0
        %880 = vmatpush.bf16.msra.mxu0 %v700
        %881 = vmatpush.bf16.msra.mxu0 %v698
        %882 = vmatpush.bf16.msra.mxu0 %v696
        %883 = vmatpush.bf16.msra.mxu0 %v694
        %884 = vmatpush.bf16.msra.mxu0 %v692
        %885 = vmatpush.bf16.msra.mxu0 %v690
        %886 = vmatpush.bf16.msra.mxu0 %v688
        %887 = vmatpush.bf16.msra.mxu0 %v686
        %888 = vmatmul.bf16.gmra.mxu0 %v362
        %v889 = vpop.f32.mrf.mxu0
        %v890 = vadd.f32 %v841, %v889
        %v891 = vpop.f32.mrf.mxu0
        %v892 = vadd.f32 %v843, %v891
        %893 = vmatmul.bf16.gmra.mxu0 %v366
        %v894 = vpop.f32.mrf.mxu0
        %v895 = vadd.f32 %v846, %v894
        %v896 = vpop.f32.mrf.mxu0
        %v897 = vadd.f32 %v848, %v896
        %898 = vmatmul.bf16.gmra.mxu0 %v370
        %v899 = vpop.f32.mrf.mxu0
        %v900 = vadd.f32 %v851, %v899
        %v901 = vpop.f32.mrf.mxu0
        %v902 = vadd.f32 %v853, %v901
        %903 = vmatmul.bf16.gmra.mxu0 %v374
        %v904 = vpop.f32.mrf.mxu0
        %v905 = vadd.f32 %v856, %v904
        %v906 = vpop.f32.mrf.mxu0
        %v907 = vadd.f32 %v858, %v906
        %908 = vmatmul.bf16.gmra.mxu0 %v378
        %v909 = vpop.f32.mrf.mxu0
        %v910 = vadd.f32 %v861, %v909
        %v911 = vpop.f32.mrf.mxu0
        %v912 = vadd.f32 %v863, %v911
        %913 = vmatmul.bf16.gmra.mxu0 %v382
        %v914 = vpop.f32.mrf.mxu0
        %v915 = vadd.f32 %v866, %v914
        %v916 = vpop.f32.mrf.mxu0
        %v917 = vadd.f32 %v868, %v916
        %918 = vmatmul.bf16.gmra.mxu0 %v386
        %v919 = vpop.f32.mrf.mxu0
        %v920 = vadd.f32 %v871, %v919
        %v921 = vpop.f32.mrf.mxu0
        %v922 = vadd.f32 %v873, %v921
        %923 = vmatmul.bf16.gmra.mxu0 %v390
        %v924 = vpop.f32.mrf.mxu0
        %v925 = vadd.f32 %v876, %v924
        %v926 = vpop.f32.mrf.mxu0
        %v927 = vadd.f32 %v878, %v926
        %928 = vdwg.mxu0
        %929 = vmatpush.bf16.msra.mxu0 %v716
        %930 = vmatpush.bf16.msra.mxu0 %v714
        %931 = vmatpush.bf16.msra.mxu0 %v712
        %932 = vmatpush.bf16.msra.mxu0 %v710
        %933 = vmatpush.bf16.msra.mxu0 %v708
        %934 = vmatpush.bf16.msra.mxu0 %v706
        %935 = vmatpush.bf16.msra.mxu0 %v704
        %936 = vmatpush.bf16.msra.mxu0 %v702
        %937 = vmatmul.bf16.gmra.mxu0 %v363
        %v938 = vpop.f32.mrf.mxu0
        %v939 = vadd.f32 %v890, %v938
        %v940 = vpop.f32.mrf.mxu0
        %v941 = vadd.f32 %v892, %v940
        %942 = vmatmul.bf16.gmra.mxu0 %v367
        %v943 = vpop.f32.mrf.mxu0
        %v944 = vadd.f32 %v895, %v943
        %v945 = vpop.f32.mrf.mxu0
        %v946 = vadd.f32 %v897, %v945
        %947 = vmatmul.bf16.gmra.mxu0 %v371
        %v948 = vpop.f32.mrf.mxu0
        %v949 = vadd.f32 %v900, %v948
        %v950 = vpop.f32.mrf.mxu0
        %v951 = vadd.f32 %v902, %v950
        %952 = vmatmul.bf16.gmra.mxu0 %v375
        %v953 = vpop.f32.mrf.mxu0
        %v954 = vadd.f32 %v905, %v953
        %v955 = vpop.f32.mrf.mxu0
        %v956 = vadd.f32 %v907, %v955
        %957 = vmatmul.bf16.gmra.mxu0 %v379
        %v958 = vpop.f32.mrf.mxu0
        %v959 = vadd.f32 %v910, %v958
        %v960 = vpop.f32.mrf.mxu0
        %v961 = vadd.f32 %v912, %v960
        %962 = vmatmul.bf16.gmra.mxu0 %v383
        %v963 = vpop.f32.mrf.mxu0
        %v964 = vadd.f32 %v915, %v963
        %v965 = vpop.f32.mrf.mxu0
        %v966 = vadd.f32 %v917, %v965
        %967 = vmatmul.bf16.gmra.mxu0 %v387
        %v968 = vpop.f32.mrf.mxu0
        %v969 = vadd.f32 %v920, %v968
        %v970 = vpop.f32.mrf.mxu0
        %v971 = vadd.f32 %v922, %v970
        %972 = vmatmul.bf16.gmra.mxu0 %v391
        %v973 = vpop.f32.mrf.mxu0
        %v974 = vadd.f32 %v925, %v973
        %v975 = vpop.f32.mrf.mxu0
        %v976 = vadd.f32 %v927, %v975
        %977 = vdwg.mxu0
        %978 = vmatpush.bf16.msra.mxu0 %v669
        %979 = vmatpush.bf16.msra.mxu0 %v667
        %980 = vmatpush.bf16.msra.mxu0 %v665
        %981 = vmatpush.bf16.msra.mxu0 %v663
        %982 = vmatpush.bf16.msra.mxu0 %v661
        %983 = vmatpush.bf16.msra.mxu0 %v659
        %984 = vmatpush.bf16.msra.mxu0 %v657
        %985 = vmatpush.bf16.msra.mxu0 %v655
        %986 = vmatmul.bf16.gmra.mxu0 %v360
        %v987 = vpop.f32.mrf.mxu0
        %v988 = vadd.f32 %v459, %v987
        %v989 = vpop.f32.mrf.mxu0
        %v990 = vadd.f32 %v459, %v989
        %991 = vmatmul.bf16.gmra.mxu0 %v364
        %v992 = vpop.f32.mrf.mxu0
        %v993 = vadd.f32 %v459, %v992
        %v994 = vpop.f32.mrf.mxu0
        %v995 = vadd.f32 %v459, %v994
        %996 = vmatmul.bf16.gmra.mxu0 %v368
        %v997 = vpop.f32.mrf.mxu0
        %v998 = vadd.f32 %v459, %v997
        %v999 = vpop.f32.mrf.mxu0
        %v1000 = vadd.f32 %v459, %v999
        %1001 = vmatmul.bf16.gmra.mxu0 %v372
        %v1002 = vpop.f32.mrf.mxu0
        %v1003 = vadd.f32 %v459, %v1002
        %v1004 = vpop.f32.mrf.mxu0
        %v1005 = vadd.f32 %v459, %v1004
        %1006 = vmatmul.bf16.gmra.mxu0 %v376
        %v1007 = vpop.f32.mrf.mxu0
        %v1008 = vadd.f32 %v459, %v1007
        %v1009 = vpop.f32.mrf.mxu0
        %v1010 = vadd.f32 %v459, %v1009
        %1011 = vmatmul.bf16.gmra.mxu0 %v380
        %v1012 = vpop.f32.mrf.mxu0
        %v1013 = vadd.f32 %v459, %v1012
        %v1014 = vpop.f32.mrf.mxu0
        %v1015 = vadd.f32 %v459, %v1014
        %1016 = vmatmul.bf16.gmra.mxu0 %v384
        %v1017 = vpop.f32.mrf.mxu0
        %v1018 = vadd.f32 %v459, %v1017
        %v1019 = vpop.f32.mrf.mxu0
        %v1020 = vadd.f32 %v459, %v1019
        %1021 = vmatmul.bf16.gmra.mxu0 %v388
        %v1022 = vpop.f32.mrf.mxu0
        %v1023 = vadd.f32 %v459, %v1022
        %v1024 = vpop.f32.mrf.mxu0
        %v1025 = vadd.f32 %v459, %v1024
        %1026 = vdwg.mxu0
        %1027 = vmatpush.bf16.msra.mxu0 %v685
        %1028 = vmatpush.bf16.msra.mxu0 %v683
        %1029 = vmatpush.bf16.msra.mxu0 %v681
        %1030 = vmatpush.bf16.msra.mxu0 %v679
        %1031 = vmatpush.bf16.msra.mxu0 %v677
        %1032 = vmatpush.bf16.msra.mxu0 %v675
        %1033 = vmatpush.bf16.msra.mxu0 %v673
        %1034 = vmatpush.bf16.msra.mxu0 %v671
        %1035 = vmatmul.bf16.gmra.mxu0 %v361
        %v1036 = vpop.f32.mrf.mxu0
        %v1037 = vadd.f32 %v988, %v1036
        %v1038 = vpop.f32.mrf.mxu0
        %v1039 = vadd.f32 %v990, %v1038
        %1040 = vmatmul.bf16.gmra.mxu0 %v365
        %v1041 = vpop.f32.mrf.mxu0
        %v1042 = vadd.f32 %v993, %v1041
        %v1043 = vpop.f32.mrf.mxu0
        %v1044 = vadd.f32 %v995, %v1043
        %1045 = vmatmul.bf16.gmra.mxu0 %v369
        %v1046 = vpop.f32.mrf.mxu0
        %v1047 = vadd.f32 %v998, %v1046
        %v1048 = vpop.f32.mrf.mxu0
        %v1049 = vadd.f32 %v1000, %v1048
        %1050 = vmatmul.bf16.gmra.mxu0 %v373
        %v1051 = vpop.f32.mrf.mxu0
        %v1052 = vadd.f32 %v1003, %v1051
        %v1053 = vpop.f32.mrf.mxu0
        %v1054 = vadd.f32 %v1005, %v1053
        %1055 = vmatmul.bf16.gmra.mxu0 %v377
        %v1056 = vpop.f32.mrf.mxu0
        %v1057 = vadd.f32 %v1008, %v1056
        %v1058 = vpop.f32.mrf.mxu0
        %v1059 = vadd.f32 %v1010, %v1058
        %1060 = vmatmul.bf16.gmra.mxu0 %v381
        %v1061 = vpop.f32.mrf.mxu0
        %v1062 = vadd.f32 %v1013, %v1061
        %v1063 = vpop.f32.mrf.mxu0
        %v1064 = vadd.f32 %v1015, %v1063
        %1065 = vmatmul.bf16.gmra.mxu0 %v385
        %v1066 = vpop.f32.mrf.mxu0
        %v1067 = vadd.f32 %v1018, %v1066
        %v1068 = vpop.f32.mrf.mxu0
        %v1069 = vadd.f32 %v1020, %v1068
        %1070 = vmatmul.bf16.gmra.mxu0 %v389
        %v1071 = vpop.f32.mrf.mxu0
        %v1072 = vadd.f32 %v1023, %v1071
        %v1073 = vpop.f32.mrf.mxu0
        %v1074 = vadd.f32 %v1025, %v1073
        %1075 = vdwg.mxu0
        %1076 = vmatpush.bf16.msra.mxu0 %v701
        %1077 = vmatpush.bf16.msra.mxu0 %v699
        %1078 = vmatpush.bf16.msra.mxu0 %v697
        %1079 = vmatpush.bf16.msra.mxu0 %v695
        %1080 = vmatpush.bf16.msra.mxu0 %v693
        %1081 = vmatpush.bf16.msra.mxu0 %v691
        %1082 = vmatpush.bf16.msra.mxu0 %v689
        %1083 = vmatpush.bf16.msra.mxu0 %v687
        %1084 = vmatmul.bf16.gmra.mxu0 %v362
        %v1085 = vpop.f32.mrf.mxu0
        %v1086 = vadd.f32 %v1037, %v1085
        %v1087 = vpop.f32.mrf.mxu0
        %v1088 = vadd.f32 %v1039, %v1087
        %1089 = vmatmul.bf16.gmra.mxu0 %v366
        %v1090 = vpop.f32.mrf.mxu0
        %v1091 = vadd.f32 %v1042, %v1090
        %v1092 = vpop.f32.mrf.mxu0
        %v1093 = vadd.f32 %v1044, %v1092
        %1094 = vmatmul.bf16.gmra.mxu0 %v370
        %v1095 = vpop.f32.mrf.mxu0
        %v1096 = vadd.f32 %v1047, %v1095
        %v1097 = vpop.f32.mrf.mxu0
        %v1098 = vadd.f32 %v1049, %v1097
        %1099 = vmatmul.bf16.gmra.mxu0 %v374
        %v1100 = vpop.f32.mrf.mxu0
        %v1101 = vadd.f32 %v1052, %v1100
        %v1102 = vpop.f32.mrf.mxu0
        %v1103 = vadd.f32 %v1054, %v1102
        %1104 = vmatmul.bf16.gmra.mxu0 %v378
        %v1105 = vpop.f32.mrf.mxu0
        %v1106 = vadd.f32 %v1057, %v1105
        %v1107 = vpop.f32.mrf.mxu0
        %v1108 = vadd.f32 %v1059, %v1107
        %1109 = vmatmul.bf16.gmra.mxu0 %v382
        %v1110 = vpop.f32.mrf.mxu0
        %v1111 = vadd.f32 %v1062, %v1110
        %v1112 = vpop.f32.mrf.mxu0
        %v1113 = vadd.f32 %v1064, %v1112
        %1114 = vmatmul.bf16.gmra.mxu0 %v386
        %v1115 = vpop.f32.mrf.mxu0
        %v1116 = vadd.f32 %v1067, %v1115
        %v1117 = vpop.f32.mrf.mxu0
        %v1118 = vadd.f32 %v1069, %v1117
        %1119 = vmatmul.bf16.gmra.mxu0 %v390
        %v1120 = vpop.f32.mrf.mxu0
        %v1121 = vadd.f32 %v1072, %v1120
        %v1122 = vpop.f32.mrf.mxu0
        %v1123 = vadd.f32 %v1074, %v1122
        %1124 = vdwg.mxu0
        %1125 = vmatpush.bf16.msra.mxu0 %v717
        %1126 = vmatpush.bf16.msra.mxu0 %v715
        %1127 = vmatpush.bf16.msra.mxu0 %v713
        %1128 = vmatpush.bf16.msra.mxu0 %v711
        %1129 = vmatpush.bf16.msra.mxu0 %v709
        %1130 = vmatpush.bf16.msra.mxu0 %v707
        %1131 = vmatpush.bf16.msra.mxu0 %v705
        %1132 = vmatpush.bf16.msra.mxu0 %v703
        %1133 = vmatmul.bf16.gmra.mxu0 %v363
        %v1134 = vpop.f32.mrf.mxu0
        %v1135 = vadd.f32 %v1086, %v1134
        %v1136 = vpop.f32.mrf.mxu0
        %v1137 = vadd.f32 %v1088, %v1136
        %1138 = vmatmul.bf16.gmra.mxu0 %v367
        %v1139 = vpop.f32.mrf.mxu0
        %v1140 = vadd.f32 %v1091, %v1139
        %v1141 = vpop.f32.mrf.mxu0
        %v1142 = vadd.f32 %v1093, %v1141
        %1143 = vmatmul.bf16.gmra.mxu0 %v371
        %v1144 = vpop.f32.mrf.mxu0
        %v1145 = vadd.f32 %v1096, %v1144
        %v1146 = vpop.f32.mrf.mxu0
        %v1147 = vadd.f32 %v1098, %v1146
        %1148 = vmatmul.bf16.gmra.mxu0 %v375
        %v1149 = vpop.f32.mrf.mxu0
        %v1150 = vadd.f32 %v1101, %v1149
        %v1151 = vpop.f32.mrf.mxu0
        %v1152 = vadd.f32 %v1103, %v1151
        %1153 = vmatmul.bf16.gmra.mxu0 %v379
        %v1154 = vpop.f32.mrf.mxu0
        %v1155 = vadd.f32 %v1106, %v1154
        %v1156 = vpop.f32.mrf.mxu0
        %v1157 = vadd.f32 %v1108, %v1156
        %1158 = vmatmul.bf16.gmra.mxu0 %v383
        %v1159 = vpop.f32.mrf.mxu0
        %v1160 = vadd.f32 %v1111, %v1159
        %v1161 = vpop.f32.mrf.mxu0
        %v1162 = vadd.f32 %v1113, %v1161
        %1163 = vmatmul.bf16.gmra.mxu0 %v387
        %v1164 = vpop.f32.mrf.mxu0
        %v1165 = vadd.f32 %v1116, %v1164
        %v1166 = vpop.f32.mrf.mxu0
        %v1167 = vadd.f32 %v1118, %v1166
        %1168 = vmatmul.bf16.gmra.mxu0 %v391
        %v1169 = vpop.f32.mrf.mxu0
        %v1170 = vadd.f32 %v1121, %v1169
        %v1171 = vpop.f32.mrf.mxu0
        %v1172 = vadd.f32 %v1123, %v1171
        %1173 = vdwg.mxu0
        %v1174 = vmax.f32 %v939, 0.0
        %v1175 = vmax.f32 %v1135, 0.0
        %v1176 = vmax.f32 %v941, 0.0
        %v1177 = vmax.f32 %v1137, 0.0
        %v1178 = vmax.f32 %v944, 0.0
        %v1179 = vmax.f32 %v1140, 0.0
        %v1180 = vmax.f32 %v946, 0.0
        %v1181 = vmax.f32 %v1142, 0.0
        %v1182 = vmax.f32 %v949, 0.0
        %v1183 = vmax.f32 %v1145, 0.0
        %v1184 = vmax.f32 %v951, 0.0
        %v1185 = vmax.f32 %v1147, 0.0
        %v1186 = vmax.f32 %v954, 0.0
        %v1187 = vmax.f32 %v1150, 0.0
        %v1188 = vmax.f32 %v956, 0.0
        %v1189 = vmax.f32 %v1152, 0.0
        %v1190 = vmax.f32 %v959, 0.0
        %v1191 = vmax.f32 %v1155, 0.0
        %v1192 = vmax.f32 %v961, 0.0
        %v1193 = vmax.f32 %v1157, 0.0
        %v1194 = vmax.f32 %v964, 0.0
        %v1195 = vmax.f32 %v1160, 0.0
        %v1196 = vmax.f32 %v966, 0.0
        %v1197 = vmax.f32 %v1162, 0.0
        %v1198 = vmax.f32 %v969, 0.0
        %v1199 = vmax.f32 %v1165, 0.0
        %v1200 = vmax.f32 %v971, 0.0
        %v1201 = vmax.f32 %v1167, 0.0
        %v1202 = vmax.f32 %v974, 0.0
        %v1203 = vmax.f32 %v1170, 0.0
        %v1204 = vmax.f32 %v976, 0.0
        %v1205 = vmax.f32 %v1172, 0.0
        %v1206 = vpack.c.bf16 %v1176, %v1174
        %v1207 = vpack.c.bf16 %v1177, %v1175
        %v1208 = vpack.c.bf16 %v1180, %v1178
        %v1209 = vpack.c.bf16 %v1181, %v1179
        %v1210 = vpack.c.bf16 %v1184, %v1182
        %v1211 = vpack.c.bf16 %v1185, %v1183
        %v1212 = vpack.c.bf16 %v1188, %v1186
        %v1213 = vpack.c.bf16 %v1189, %v1187
        %v1214 = vpack.c.bf16 %v1192, %v1190
        %v1215 = vpack.c.bf16 %v1193, %v1191
        %v1216 = vpack.c.bf16 %v1196, %v1194
        %v1217 = vpack.c.bf16 %v1197, %v1195
        %v1218 = vpack.c.bf16 %v1200, %v1198
        %v1219 = vpack.c.bf16 %v1201, %v1199
        %v1220 = vpack.c.bf16 %v1204, %v1202
        %v1221 = vpack.c.bf16 %v1205, %v1203
        %v1222 = vld [vmem:[#allocation8] sm:$0xf]
        %v1223 = vld [vmem:[#allocation8 + $0x4] sm:$0xf]
        %v1224 = vld [vmem:[#allocation8 + $0x8] sm:$0xf]
        %v1225 = vld [vmem:[#allocation8 + $0xc] sm:$0xf]
        %v1226 = vld [vmem:[#allocation8 + $0x10] sm:$0xf]
        %v1227 = vld [vmem:[#allocation8 + $0x14] sm:$0xf]
        %v1228 = vld [vmem:[#allocation8 + $0x18] sm:$0xf]
        %v1229 = vld [vmem:[#allocation8 + $0x1c] sm:$0xf]
        %v1230 = vld [vmem:[#allocation8 + $0x20] sm:$0xf]
        %v1231 = vld [vmem:[#allocation8 + $0x24] sm:$0xf]
        %v1232 = vld [vmem:[#allocation8 + $0x28] sm:$0xf]
        %v1233 = vld [vmem:[#allocation8 + $0x2c] sm:$0xf]
        %v1234 = vld [vmem:[#allocation8 + $0x30] sm:$0xf]
        %v1235 = vld [vmem:[#allocation8 + $0x34] sm:$0xf]
        %v1236 = vld [vmem:[#allocation8 + $0x38] sm:$0xf]
        %v1237 = vld [vmem:[#allocation8 + $0x3c] sm:$0xf]
        %v1238 = vld [vmem:[#allocation8 + $0x40] sm:$0xf]
        %v1239 = vld [vmem:[#allocation8 + $0x44] sm:$0xf]
        %v1240 = vld [vmem:[#allocation8 + $0x48] sm:$0xf]
        %v1241 = vld [vmem:[#allocation8 + $0x4c] sm:$0xf]
        %v1242 = vld [vmem:[#allocation8 + $0x50] sm:$0xf]
        %v1243 = vld [vmem:[#allocation8 + $0x54] sm:$0xf]
        %v1244 = vld [vmem:[#allocation8 + $0x58] sm:$0xf]
        %v1245 = vld [vmem:[#allocation8 + $0x5c] sm:$0xf]
        %v1246 = vld [vmem:[#allocation8 + $0x60] sm:$0xf]
        %v1247 = vld [vmem:[#allocation8 + $0x64] sm:$0xf]
        %v1248 = vld [vmem:[#allocation8 + $0x68] sm:$0xf]
        %v1249 = vld [vmem:[#allocation8 + $0x6c] sm:$0xf]
        %v1250 = vld [vmem:[#allocation8 + $0x70] sm:$0xf]
        %v1251 = vld [vmem:[#allocation8 + $0x74] sm:$0xf]
        %v1252 = vld [vmem:[#allocation8 + $0x78] sm:$0xf]
        %v1253 = vld [vmem:[#allocation8 + $0x7c] sm:$0xf]
        %v1254 = vld [vmem:[%s4] sm:$0x1]
        %v1256 = vperm.slane %v1254, 0
        %v1290 = vunpack.c.l.b16 %v1222
        %v1291 = vunpack.c.l.b16 %v1223
        %v1292 = vunpack.c.l.b16 %v1224
        %v1293 = vunpack.c.l.b16 %v1225
        %v1294 = vunpack.c.l.b16 %v1226
        %v1295 = vunpack.c.l.b16 %v1227
        %v1296 = vunpack.c.l.b16 %v1228
        %v1297 = vunpack.c.l.b16 %v1229
        %v1298 = vunpack.c.l.b16 %v1230
        %v1299 = vunpack.c.l.b16 %v1231
        %v1300 = vunpack.c.l.b16 %v1232
        %v1301 = vunpack.c.l.b16 %v1233
        %v1302 = vunpack.c.l.b16 %v1234
        %v1303 = vunpack.c.l.b16 %v1235
        %v1304 = vunpack.c.l.b16 %v1236
        %v1305 = vunpack.c.l.b16 %v1237
        %v1306 = vunpack.c.l.b16 %v1238
        %v1307 = vunpack.c.l.b16 %v1239
        %v1308 = vunpack.c.l.b16 %v1240
        %v1309 = vunpack.c.l.b16 %v1241
        %v1310 = vunpack.c.l.b16 %v1242
        %v1311 = vunpack.c.l.b16 %v1243
        %v1312 = vunpack.c.l.b16 %v1244
        %v1313 = vunpack.c.l.b16 %v1245
        %v1314 = vunpack.c.l.b16 %v1246
        %v1315 = vunpack.c.l.b16 %v1247
        %v1316 = vunpack.c.l.b16 %v1248
        %v1317 = vunpack.c.l.b16 %v1249
        %v1318 = vunpack.c.l.b16 %v1250
        %v1319 = vunpack.c.l.b16 %v1251
        %v1320 = vunpack.c.l.b16 %v1252
        %v1321 = vunpack.c.l.b16 %v1253
        %v1322 = vpack.c.b16 %v1291, %v1290
        %v1323 = vpack.c.b16 %v1293, %v1292
        %v1324 = vpack.c.b16 %v1295, %v1294
        %v1325 = vpack.c.b16 %v1297, %v1296
        %v1326 = vpack.c.b16 %v1299, %v1298
        %v1327 = vpack.c.b16 %v1301, %v1300
        %v1328 = vpack.c.b16 %v1303, %v1302
        %v1329 = vpack.c.b16 %v1305, %v1304
        %v1330 = vpack.c.b16 %v1307, %v1306
        %v1331 = vpack.c.b16 %v1309, %v1308
        %v1332 = vpack.c.b16 %v1311, %v1310
        %v1333 = vpack.c.b16 %v1313, %v1312
        %v1334 = vpack.c.b16 %v1315, %v1314
        %v1335 = vpack.c.b16 %v1317, %v1316
        %v1336 = vpack.c.b16 %v1319, %v1318
        %v1337 = vpack.c.b16 %v1321, %v1320
        %1354 = vmatpush.bf16.msra.mxu0 %v1329
        %1355 = vmatpush.bf16.msra.mxu0 %v1328
        %1356 = vmatpush.bf16.msra.mxu0 %v1327
        %1357 = vmatpush.bf16.msra.mxu0 %v1326
        %1358 = vmatpush.bf16.msra.mxu0 %v1325
        %1359 = vmatpush.bf16.msra.mxu0 %v1324
        %1360 = vmatpush.bf16.msra.mxu0 %v1323
        %1361 = vmatpush.bf16.msra.mxu0 %v1322
        %1362 = vmatmul.bf16.gmra.mxu0 %v1206
        %v1363 = vpop.f32.mrf.mxu0
        %v1364 = vadd.f32 %v1256, %v1363
        %v1365 = vpop.f32.mrf.mxu0
        %v1366 = vadd.f32 %v1256, %v1365
        %1367 = vmatmul.bf16.gmra.mxu0 %v1208
        %v1368 = vpop.f32.mrf.mxu0
        %v1369 = vadd.f32 %v1256, %v1368
        %v1370 = vpop.f32.mrf.mxu0
        %v1371 = vadd.f32 %v1256, %v1370
        %1372 = vmatmul.bf16.gmra.mxu0 %v1210
        %v1373 = vpop.f32.mrf.mxu0
        %v1374 = vadd.f32 %v1256, %v1373
        %v1375 = vpop.f32.mrf.mxu0
        %v1376 = vadd.f32 %v1256, %v1375
        %1377 = vmatmul.bf16.gmra.mxu0 %v1212
        %v1378 = vpop.f32.mrf.mxu0
        %v1379 = vadd.f32 %v1256, %v1378
        %v1380 = vpop.f32.mrf.mxu0
        %v1381 = vadd.f32 %v1256, %v1380
        %1382 = vmatmul.bf16.gmra.mxu0 %v1214
        %v1383 = vpop.f32.mrf.mxu0
        %v1384 = vadd.f32 %v1256, %v1383
        %v1385 = vpop.f32.mrf.mxu0
        %v1386 = vadd.f32 %v1256, %v1385
        %1387 = vmatmul.bf16.gmra.mxu0 %v1216
        %v1388 = vpop.f32.mrf.mxu0
        %v1389 = vadd.f32 %v1256, %v1388
        %v1390 = vpop.f32.mrf.mxu0
        %v1391 = vadd.f32 %v1256, %v1390
        %1392 = vmatmul.bf16.gmra.mxu0 %v1218
        %v1393 = vpop.f32.mrf.mxu0
        %v1394 = vadd.f32 %v1256, %v1393
        %v1395 = vpop.f32.mrf.mxu0
        %v1396 = vadd.f32 %v1256, %v1395
        %1397 = vmatmul.bf16.gmra.mxu0 %v1220
        %v1398 = vpop.f32.mrf.mxu0
        %v1399 = vadd.f32 %v1256, %v1398
        %v1400 = vpop.f32.mrf.mxu0
        %v1401 = vadd.f32 %v1256, %v1400
        %1402 = vdwg.mxu0
        %1403 = vmatpush.bf16.msra.mxu0 %v1337
        %1404 = vmatpush.bf16.msra.mxu0 %v1336
        %1405 = vmatpush.bf16.msra.mxu0 %v1335
        %1406 = vmatpush.bf16.msra.mxu0 %v1334
        %1407 = vmatpush.bf16.msra.mxu0 %v1333
        %1408 = vmatpush.bf16.msra.mxu0 %v1332
        %1409 = vmatpush.bf16.msra.mxu0 %v1331
        %1410 = vmatpush.bf16.msra.mxu0 %v1330
        %1411 = vmatmul.bf16.gmra.mxu0 %v1207
        %v1412 = vpop.f32.mrf.mxu0
        %v1413 = vadd.f32 %v1364, %v1412
        %v1414 = vpop.f32.mrf.mxu0
        %v1415 = vadd.f32 %v1366, %v1414
        %1416 = vmatmul.bf16.gmra.mxu0 %v1209
        %v1417 = vpop.f32.mrf.mxu0
        %v1418 = vadd.f32 %v1369, %v1417
        %v1419 = vpop.f32.mrf.mxu0
        %v1420 = vadd.f32 %v1371, %v1419
        %1421 = vmatmul.bf16.gmra.mxu0 %v1211
        %v1422 = vpop.f32.mrf.mxu0
        %v1423 = vadd.f32 %v1374, %v1422
        %v1424 = vpop.f32.mrf.mxu0
        %v1425 = vadd.f32 %v1376, %v1424
        %1426 = vmatmul.bf16.gmra.mxu0 %v1213
        %v1427 = vpop.f32.mrf.mxu0
        %v1428 = vadd.f32 %v1379, %v1427
        %v1429 = vpop.f32.mrf.mxu0
        %v1430 = vadd.f32 %v1381, %v1429
        %1431 = vmatmul.bf16.gmra.mxu0 %v1215
        %v1432 = vpop.f32.mrf.mxu0
        %v1433 = vadd.f32 %v1384, %v1432
        %v1434 = vpop.f32.mrf.mxu0
        %v1435 = vadd.f32 %v1386, %v1434
        %1436 = vmatmul.bf16.gmra.mxu0 %v1217
        %v1437 = vpop.f32.mrf.mxu0
        %v1438 = vadd.f32 %v1389, %v1437
        %v1439 = vpop.f32.mrf.mxu0
        %v1440 = vadd.f32 %v1391, %v1439
        %1441 = vmatmul.bf16.gmra.mxu0 %v1219
        %v1442 = vpop.f32.mrf.mxu0
        %v1443 = vadd.f32 %v1394, %v1442
        %v1444 = vpop.f32.mrf.mxu0
        %v1445 = vadd.f32 %v1396, %v1444
        %1446 = vmatmul.bf16.gmra.mxu0 %v1221
        %v1447 = vpop.f32.mrf.mxu0
        %v1448 = vadd.f32 %v1399, %v1447
        %v1449 = vpop.f32.mrf.mxu0
        %v1450 = vadd.f32 %v1401, %v1449
        %1451 = vdwg.mxu0
        %1452 = vst [vmem:[%s293] sm:$0xff] %v1413
        %1453 = vst [vmem:[%s293 + $0x8] sm:$0xff] %v1415
        %1454 = vst [vmem:[%s293 + $0x10] sm:$0xff] %v1418
        %1455 = vst [vmem:[%s293 + $0x18] sm:$0xff] %v1420
        %1456 = vst [vmem:[%s293 + $0x20] sm:$0xff] %v1423
        %1457 = vst [vmem:[%s293 + $0x28] sm:$0xff] %v1425
        %1458 = vst [vmem:[%s293 + $0x30] sm:$0xff] %v1428
        %1459 = vst [vmem:[%s293 + $0x38] sm:$0xff] %v1430
        %1460 = vst [vmem:[%s293 + $0x40] sm:$0xff] %v1433
        %1461 = vst [vmem:[%s293 + $0x48] sm:$0xff] %v1435
        %1462 = vst [vmem:[%s293 + $0x50] sm:$0xff] %v1438
        %1463 = vst [vmem:[%s293 + $0x58] sm:$0xff] %v1440
        %1464 = vst [vmem:[%s293 + $0x60] sm:$0xff] %v1443
        %1465 = vst [vmem:[%s293 + $0x68] sm:$0xff] %v1445
        %1466 = vst [vmem:[%s293 + $0x70] sm:$0xff] %v1448
        %1467 = vst [vmem:[%s293 + $0x78] sm:$0xff] %v1450
        %s1468 = sand.u32 %s142, 1
        %s1469 = scalar_lea.sflag [#allocation4], %s1468
        %s1470 = sand.u32 %s142, 1
        %s1471 = smul.addr %s1470, 128
        %s1472 = scalar_lea.vmem [#allocation10], %s1471
        // Predicated region
        $region57: #{tpu_custom_call.1} parent=39 // pred_check
          %p1473 = pneg %p152
        $region58: #{tpu_custom_call.1} parent=39 // pred_check_branch
          %1475 = sbr.rel (%p1473) target = $region60
        $region59: #{tpu_custom_call.1} parent=39 // pred_region
          %s1476 = smul.u32 16, %s24
          %1478 = vsyncadd %s1469, 0
          %s1479 = smul.addr %s1476, 8
          %s1480 = scalar_lea.hbm %s5, %s1479
          %s1481 = sshll.u32 %s1472, 4
          %s1482 = int_to_ptr.vmem [resolvable:$true] %s1481
          %s1483 = sshll.u32 %s1480, 4
          %s1484 = int_to_ptr.hbm [resolvable:$true] %s1483
          %1489 = dma.vmem_to_hbm [thread:$0]  %s1482, 2048, %s1484, %s1469, 128, 128, 8
        $region60: #{tpu_custom_call.1} parent=39 // pred_fallthru
          _
      $region40: #{tpu_custom_call.1} parent=5 // pred_fallthru
        _
      %p1490 = scmp.le.s32.totalorder 2, %s19
      // Predicated region
      $region61: #{tpu_custom_call.1} parent=5 // pred_check
        %p1491 = pneg %p1490
      $region62: #{tpu_custom_call.1} parent=5 // pred_check_branch
        %1493 = sbr.rel (%p1491) target = $region64
      $region63: #{tpu_custom_call.1} parent=5 // pred_region
        %s1494 = ssub.s32 %s19, 2
        // Predicated region
        $region65: #{tpu_custom_call.1} parent=63 // pred_check
          %p1495 = pneg %p158
        $region66: #{tpu_custom_call.1} parent=63 // pred_check_branch
          %1497 = sbr.rel (%p1495) target = $region68
        $region67: #{tpu_custom_call.1} parent=63 // pred_region
          %s1498 = sand.u32 %s143, 1
          %s1499 = scalar_lea.sflag [#allocation4], %s1498
          %s1500 = sand.u32 %s143, 1
          %s1501 = smul.addr %s1500, 128
          %s1502 = scalar_lea.vmem [#allocation10], %s1501
          %1504 = dma.done %s1499, 2048
        $region68: #{tpu_custom_call.1} parent=63 // pred_fallthru
          _
      $region64: #{tpu_custom_call.1} parent=5 // pred_fallthru
        _
    $region6: #{tpu_custom_call.1} parent=1 // loop_footer
      %s23 = sadd.s32 1, %s19
    $region7: #{tpu_custom_call.1} parent=1 // loop_footer_branch
      %18 = sbr.rel target = $region3
    $region8: #{tpu_custom_call.1} parent=1 // loop_exit
      _
    %1505 = vsyncpa [#allocation3], 1
    %s1506 = scalar_lea.sflag [#allocation3], 1
    %1507 = vsyncpa %s1506, 1
    %1508 = vsyncpa [#allocation6], 1
    %1509 = vsyncpa [#allocation9], 1
    %1510 = vsyncpa [#allocation4], 1
    %s1511 = scalar_lea.sflag [#allocation4], 1
    %1512 = vsyncpa %s1511, 1

</llo_original>
